<compile_context>
chip_gen: v5e
topology: v5e:2x2
jax: 0.10.0
libtpu: 0.0.40
codegen_flags: <defaults>
</compile_context>

<pallas_src>
import jax
import jax.numpy as jnp
from jax.experimental import pallas as pl
from jax.experimental.pallas import tpu as pltpu


def _resolve_target_shape(target_shape, feat):
    """Resolve a possible -1 in the trailing target shape (torch.view semantics).

    Raises ValueError on non-divisible -1 or element-count mismatch, matching
    torch.view's behavior instead of silently producing a wrong shape.
    """
    dims = list(target_shape)
    known = 1
    neg_idx = None
    for i, d in enumerate(dims):
        d = int(d)
        if d == -1:
            if neg_idx is not None:
                raise ValueError("only one -1 is allowed in the target shape")
            neg_idx = i
        else:
            known *= d
        dims[i] = d
    if neg_idx is not None:
        if known == 0 or feat % known != 0:
            raise ValueError(
                f"cannot reshape {feat} trailing elements into shape {tuple(target_shape)}"
            )
        dims[neg_idx] = feat // known
    total = 1
    for d in dims:
        total *= d
    if total != feat:
        raise ValueError(
            f"target shape {tuple(dims)} has {total} elements, expected {feat}"
        )
    return tuple(dims)


def _dma_copy_kernel(x_hbm, o_hbm, sem):
    # Single contiguous HBM->HBM DMA: the DMA engine streams at full HBM
    # bandwidth, never touches VMEM, and burns no vld/vst VLIW slots.
    cp = pltpu.make_async_copy(x_hbm, o_hbm, sem)
    cp.start()
    cp.wait()


def pallas_reshape(x, target_shape, *, materialize=False):
    """Equivalent of torch Reshape(shape=target_shape).forward(x).

    Default (materialize=False): metadata-only view, zero data movement —
    the correct and fastest implementation on every TPU generation.

    materialize=True: force a freshly materialized output buffer via a single
    HBM->HBM DMA copy kernel (useful only when a distinct buffer is required,
    e.g. to break aliasing with the input).
    """
    B = x.shape[0]
    feat = 1
    for d in x.shape[1:]:
        feat *= int(d)
    out_shape = (B,) + _resolve_target_shape(target_shape, feat)

    # Fast path: contiguous row-major reshape is a metadata-only reinterpretation.
    x_view = jnp.reshape(x, out_shape)
    if not materialize:
        return x_view

    total = B * feat
    if total == 0:
        return x_view
    itemsize = jnp.dtype(x.dtype).itemsize

    return pl.pallas_call(
        _dma_copy_kernel,
        out_shape=jax.ShapeDtypeStruct(out_shape, x.dtype),
        in_specs=[pl.BlockSpec(memory_space=pl.ANY)],
        out_specs=pl.BlockSpec(memory_space=pl.ANY),
        scratch_shapes=[pltpu.SemaphoreType.DMA(())],
        cost_estimate=pl.CostEstimate(
            flops=0,
            transcendentals=0,
            bytes_accessed=2 * total * itemsize,
        ),
    )(x_view)


if __name__ == "__main__":
    key = jax.random.PRNGKey(0)
    # Small NCHW input consistent with a digit-recognizer conv stack.
    B, C, H, W = 2, 4, 16, 16
    x = jax.random.normal(key, (B, C, H, W), dtype=jnp.float32)

    # 1) Default path (metadata-only view) — typical "flatten before FC" usage.
    out = pallas_reshape(x, [C * H * W])
    out = jax.block_until_ready(out)
    ref = jnp.reshape(x, (B, C * H * W))
    assert out.shape == (B, C * H * W), out.shape
    assert out.dtype == x.dtype
    assert bool(jnp.all(out == ref))

    # 2) Materialized path — exercises the Pallas HBM->HBM DMA copy kernel.
    out_copy = pallas_reshape(x, [C * H * W], materialize=True)
    out_copy = jax.block_until_ready(out_copy)
    assert out_copy.shape == (B, C * H * W), out_copy.shape
    assert out_copy.dtype == x.dtype
    assert bool(jnp.all(out_copy == ref))

    # 3) -1 in the target shape (torch.view semantics), materialized.
    out2 = pallas_reshape(x, [-1, H, W], materialize=True)
    out2 = jax.block_until_ready(out2)
    ref2 = jnp.reshape(x, (B, C, H, W))
    assert out2.shape == (B, C, H, W), out2.shape
    assert bool(jnp.all(out2 == ref2))

    print("KERNEL_OK")
</pallas_src>

<mosaic_0001>
module attributes {stable_mosaic.version = 11 : i64} {
  func.func @_dma_copy_kernel(%arg0: memref<2x1024xf32, #tpu.memory_space<any>>, %arg1: memref<2x1024xf32, #tpu.memory_space<any>>, %arg2: memref<!tpu.dma_semaphore, #tpu.memory_space<semaphore_mem>>) attributes {dimension_semantics = [], scalar_prefetch = 0 : i64, scratch_operands = 1 : i64, tpu.core_type = #tpu.core_type<tc>} {
    tpu.enqueue_dma source(%arg0 : memref<2x1024xf32, #tpu.memory_space<any>>) target(%arg1 : memref<2x1024xf32, #tpu.memory_space<any>>) target_semaphore(%arg2 : memref<!tpu.dma_semaphore, #tpu.memory_space<semaphore_mem>>)
    tpu.wait_dma2 semaphore(%arg2 : memref<!tpu.dma_semaphore, #tpu.memory_space<semaphore_mem>>) src(%arg0 : memref<2x1024xf32, #tpu.memory_space<any>>) dst(%arg1 : memref<2x1024xf32, #tpu.memory_space<any>>)
    return
  }
}

</mosaic_0001>

<llo_original>
// kernel: tpu_custom_call.1
$region0: #{tpu_custom_call.1}
  #allocation0 [shape = 'u32[]', space=smem, size = 0x4, offset = 0x4, fixed_abs, tag = 'smem constant byte address 0x4 - core index']
  #allocation1 [shape = 'u32[72,128]{1,0:T(1,128)}', space=vmem, size = 0x9000, scoped, tag = 'internal scratch']
  #allocation2 [shape = 's32[1]{0}', space=sflag, size = 0x4, scoped, tag = 'scratch operand']
  #allocation3 [shape = 's32[]', space=sflag, size = 0x4, offset = 0, fixed_abs, tag = 'sflag constant byte address 0x0 - dummy sync flag']
  #allocation4 [shape = 'u32[0]{0}', space=smem, size = 0, offset = 0, fixed_abs, tag = 'smem constant byte address 0x0 - null']
  %s0 = inlined_call_operand.hbm [shape: f32[2,1024], index: 0, kind: input, shape index: {}]
  %s1 = inlined_call_operand.hbm [shape: f32[2,1024], index: 1, kind: output, shape index: {}]
  %s2 = sld [smem:[#allocation0]]
  $region2: #{tpu_custom_call.1} parent=0
    _
  %s4 = ssub.s32 1, %s2
  %s5 = scalar_select 0, %s4, %s2
  %s7 = sshll.u32 1, 14
  %s8 = sxor.u32 4294967295, %s7
  %s10 = sshll.u32 %s0, 4
  %s11 = int_to_ptr.hbm [resolvable:$true] %s10
  %s12 = sshll.u32 %s1, 4
  %s13 = int_to_ptr.hbm [resolvable:$true] %s12
  %16 = dma.general %s11, 256, %s13, [#allocation2], [#allocation3], [#allocation4], 0, 0
  %s17 = smul.u32 2, 1
  %s18 = smul.u32 %s17, 8
  %s19 = sshll.u32 %s18, 4
  %20 = dma.done [#allocation2], %s19
  %21 = vsyncmov [#allocation2]
  %s22 = vpop.sfrf %21
  %p23 = scmp.eq.s32.totalorder %s22, 0
  %p24 = pneg %p23
  %26 = shalt.err (%p24)

</llo_original>
